<compile_context>
chip_gen: v5e
topology: v5e:2x2
jax: 0.10.0
libtpu: 0.0.40
codegen_flags: <defaults>
</compile_context>

<pallas_src>
import functools

import jax
import jax.numpy as jnp
from jax.experimental import pallas as pl
from jax.experimental.pallas import tpu as pltpu

NEG_SLOPE = 0.01  # PyTorch nn.LeakyReLU default negative_slope

# ~3 KB/row of padded VMEM (x 2x256B, out 2x512B padded to 128 lanes, ~1.5 KB
# of f32 intermediates). 4096 rows ~= 12 MiB, safe under v5e's 16 MiB scoped
# default and trivially under v6e/v7x's 32 MiB default.
_TB_MAX_SAFE = 4096


def _leaky_relu(x):
    # For 0 < slope < 1: max(x, slope*x) == leaky_relu(x). One mul + one max.
    return jnp.maximum(x, NEG_SLOPE * x)


def mlp_kernel(x_ref, w1_ref, b1_ref, w2_ref, b2_ref, w3_ref, b3_ref, o_ref):
    # One batch tile per grid step; weights/biases are VMEM-resident (constant
    # index maps). Three chained MXU matmuls + bias + LeakyReLU, f32 accumulate.
    cdt = w1_ref.dtype  # matmul-input dtype (f32, or bf16 in use_bf16 mode)

    h = jnp.dot(x_ref[...], w1_ref[...], preferred_element_type=jnp.float32) + b1_ref[...]
    h = _leaky_relu(h)
    h = jnp.dot(h.astype(cdt), w2_ref[...], preferred_element_type=jnp.float32) + b2_ref[...]
    h = _leaky_relu(h)
    h = jnp.dot(h.astype(cdt), w3_ref[...], preferred_element_type=jnp.float32) + b3_ref[...]
    h = _leaky_relu(h)

    # TODO(synk): output padded (TB, 5)->(TB, 128) lanes; a lane-dense out_spec
    # would need the consumer to accept a padded (B, 128) output.
    o_ref[...] = h.astype(o_ref.dtype)


def _round_up(v, m):
    return ((v + m - 1) // m) * m


def dnn_forward(x, params, *, block_b=4096, use_bf16=False):
    """Forward pass y = LeakyReLU(LeakyReLU(LeakyReLU(x@W1+b1)@W2+b2)@W3+b3)."""
    w1, b1, w2, b2, w3, b3 = params
    B, in_dim = x.shape
    out_dim = w3.shape[1]

    # Optional bf16 matmul inputs (accuracy budget required): halves x HBM
    # traffic and uses the bf16-native MXU path. Biases stay f32; accumulation,
    # bias-add and LeakyReLU stay f32 inside the kernel.
    if use_bf16:
        x = x.astype(jnp.bfloat16)
        w1, w2, w3 = (w.astype(jnp.bfloat16) for w in (w1, w2, w3))

    # Batch tile selection:
    #  - big tiles (up to 4096 rows) amortize the ~0.35us per-grid-step pipeline
    #    overhead and keep the x-read DMA near the HBM roofline;
    #  - split into >= 2 (even-count) tiles whenever possible so the "parallel"
    #    batch axis can shard across v7x's two TensorCores;
    #  - keep rows a multiple of 8 (f32 sublane); pl.cdiv handles a ragged tail.
    block_b = min(block_b, _TB_MAX_SAFE)
    TB = min(block_b, max(8, _round_up(pl.cdiv(B, 2), 8)))
    TB = min(TB, B) if B >= 8 else B
    grid = (pl.cdiv(B, TB),)

    const = lambda i: (0, 0)  # weights/biases: same block every grid step

    return pl.pallas_call(
        mlp_kernel,
        out_shape=jax.ShapeDtypeStruct((B, out_dim), jnp.float32),
        grid_spec=pltpu.PrefetchScalarGridSpec(
            num_scalar_prefetch=0,
            grid=grid,
            in_specs=[
                pl.BlockSpec((TB, in_dim), lambda i: (i, 0)),  # x: tiled on batch
                pl.BlockSpec(w1.shape, const),
                pl.BlockSpec(b1.shape, const),
                pl.BlockSpec(w2.shape, const),
                pl.BlockSpec(b2.shape, const),
                pl.BlockSpec(w3.shape, const),
                pl.BlockSpec(b3.shape, const),
            ],
            out_specs=pl.BlockSpec((TB, out_dim), lambda i: (i, 0)),
        ),
        compiler_params=pltpu.CompilerParams(
            # Batch tiles are independent -> shard across v7x's 2 TensorCores.
            dimension_semantics=("parallel",),
        ),
    )(x, w1, b1, w2, b2, w3, b3)


def init_params(key):
    """Deterministic init mimicking PyTorch nn.Linear default (uniform ±1/sqrt(fan_in))."""
    dims = [(64, 50), (50, 32), (32, 5)]
    params = []
    for (fan_in, fan_out) in dims:
        key, kw, kb = jax.random.split(key, 3)
        bound = 1.0 / jnp.sqrt(fan_in)
        w = jax.random.uniform(kw, (fan_in, fan_out), jnp.float32, -bound, bound)
        b = jax.random.uniform(kb, (1, fan_out), jnp.float32, -bound, bound)
        params.extend([w, b])
    return tuple(params)


def reference_forward(x, params):
    w1, b1, w2, b2, w3, b3 = params
    h = jax.nn.leaky_relu(x @ w1 + b1, NEG_SLOPE)
    h = jax.nn.leaky_relu(h @ w2 + b2, NEG_SLOPE)
    h = jax.nn.leaky_relu(h @ w3 + b3, NEG_SLOPE)
    return h


if __name__ == "__main__":
    key = jax.random.PRNGKey(0)
    key, kx1, kx2 = jax.random.split(key, 3)
    params = init_params(key)

    # Small-batch case (single grid step, whole batch in one tile).
    batch = 8
    x = jax.random.normal(kx1, (batch, 64), jnp.float32)
    out = jax.block_until_ready(dnn_forward(x, params))
    ref = reference_forward(x, params)
    assert out.shape == (batch, 5)
    assert jnp.allclose(out, ref, atol=1e-5, rtol=1e-5), "mismatch vs JAX reference (B=8)"

    # Multi-tile case: B=64 -> TB=32, grid=(2,) exercises the pipelined,
    # two-TensorCore-eligible path.
    batch2 = 64
    x2 = jax.random.normal(kx2, (batch2, 64), jnp.float32)
    out2 = jax.block_until_ready(dnn_forward(x2, params))
    ref2 = reference_forward(x2, params)
    assert out2.shape == (batch2, 5)
    assert jnp.allclose(out2, ref2, atol=1e-5, rtol=1e-5), "mismatch vs JAX reference (B=64)"

    # Gated bf16 path smoke test (explicit accuracy budget: relaxed tolerance).
    out3 = jax.block_until_ready(dnn_forward(x2, params, use_bf16=True))
    assert out3.shape == (batch2, 5)
    assert jnp.allclose(out3, ref2, atol=3e-2, rtol=3e-2), "bf16 path out of budget"

    print("KERNEL_OK")
</pallas_src>

<mosaic_0001>
module attributes {stable_mosaic.version = 11 : i64} {
  func.func @mlp_kernel(%arg0: i32, %arg1: memref<8x64xf32, #tpu.memory_space<vmem>>, %arg2: memref<64x50xf32, #tpu.memory_space<vmem>>, %arg3: memref<1x50xf32, #tpu.memory_space<vmem>>, %arg4: memref<50x32xf32, #tpu.memory_space<vmem>>, %arg5: memref<1x32xf32, #tpu.memory_space<vmem>>, %arg6: memref<32x5xf32, #tpu.memory_space<vmem>>, %arg7: memref<1x5xf32, #tpu.memory_space<vmem>>, %arg8: memref<8x5xf32, #tpu.memory_space<vmem>>) attributes {dimension_semantics = [#tpu.dimension_semantics<parallel>], iteration_bounds = array<i64: 1>, scalar_prefetch = 0 : i64, scratch_operands = 0 : i64, tpu.core_type = #tpu.core_type<tc>, window_params = [{transform_indices = @transform_0, window_bounds = array<i64: 8, 64>}, {pipeline_mode = #tpu.pipeline_mode<synchronous>, transform_indices = @transform_1, window_bounds = array<i64: 64, 50>}, {pipeline_mode = #tpu.pipeline_mode<synchronous>, transform_indices = @transform_2, window_bounds = array<i64: 1, 50>}, {pipeline_mode = #tpu.pipeline_mode<synchronous>, transform_indices = @transform_3, window_bounds = array<i64: 50, 32>}, {pipeline_mode = #tpu.pipeline_mode<synchronous>, transform_indices = @transform_4, window_bounds = array<i64: 1, 32>}, {pipeline_mode = #tpu.pipeline_mode<synchronous>, transform_indices = @transform_5, window_bounds = array<i64: 32, 5>}, {pipeline_mode = #tpu.pipeline_mode<synchronous>, transform_indices = @transform_6, window_bounds = array<i64: 1, 5>}, {transform_indices = @transform_7, window_bounds = array<i64: 8, 5>}]} {
    %c0 = arith.constant 0 : index
    %c0_0 = arith.constant 0 : index
    %0 = vector.load %arg1[%c0, %c0_0] : memref<8x64xf32, #tpu.memory_space<vmem>>, vector<8x64xf32>
    %c0_1 = arith.constant 0 : index
    %c0_2 = arith.constant 0 : index
    %1 = vector.load %arg2[%c0_1, %c0_2] : memref<64x50xf32, #tpu.memory_space<vmem>>, vector<64x50xf32>
    %cst = arith.constant dense<0.000000e+00> : vector<8x50xf32>
    %2 = tpu.matmul %0, %1, %cst {dimension_numbers = #tpu.dot_dimension_numbers<[1], [0], [0], [1], [0, 0, 1, 1], [], []>} : vector<8x64xf32>, vector<64x50xf32>, vector<8x50xf32> -> vector<8x50xf32>
    %c0_3 = arith.constant 0 : index
    %c0_4 = arith.constant 0 : index
    %3 = vector.load %arg3[%c0_3, %c0_4] : memref<1x50xf32, #tpu.memory_space<vmem>>, vector<1x50xf32>
    %4 = vector.broadcast %3 : vector<1x50xf32> to vector<8x50xf32>
    %5 = arith.addf %2, %4 : vector<8x50xf32>
    %cst_5 = arith.constant 0.00999999977 : f32
    %6 = vector.broadcast %cst_5 : f32 to vector<8x50xf32>
    %7 = arith.mulf %6, %5 : vector<8x50xf32>
    %8 = arith.maximumf %5, %7 : vector<8x50xf32>
    %c0_6 = arith.constant 0 : index
    %c0_7 = arith.constant 0 : index
    %9 = vector.load %arg4[%c0_6, %c0_7] : memref<50x32xf32, #tpu.memory_space<vmem>>, vector<50x32xf32>
    %cst_8 = arith.constant dense<0.000000e+00> : vector<8x32xf32>
    %10 = tpu.matmul %8, %9, %cst_8 {dimension_numbers = #tpu.dot_dimension_numbers<[1], [0], [0], [1], [0, 0, 1, 1], [], []>} : vector<8x50xf32>, vector<50x32xf32>, vector<8x32xf32> -> vector<8x32xf32>
    %c0_9 = arith.constant 0 : index
    %c0_10 = arith.constant 0 : index
    %11 = vector.load %arg5[%c0_9, %c0_10] : memref<1x32xf32, #tpu.memory_space<vmem>>, vector<1x32xf32>
    %12 = vector.broadcast %11 : vector<1x32xf32> to vector<8x32xf32>
    %13 = arith.addf %10, %12 : vector<8x32xf32>
    %cst_11 = arith.constant 0.00999999977 : f32
    %14 = vector.broadcast %cst_11 : f32 to vector<8x32xf32>
    %15 = arith.mulf %14, %13 : vector<8x32xf32>
    %16 = arith.maximumf %13, %15 : vector<8x32xf32>
    %c0_12 = arith.constant 0 : index
    %c0_13 = arith.constant 0 : index
    %17 = vector.load %arg6[%c0_12, %c0_13] : memref<32x5xf32, #tpu.memory_space<vmem>>, vector<32x5xf32>
    %cst_14 = arith.constant dense<0.000000e+00> : vector<8x5xf32>
    %18 = tpu.matmul %16, %17, %cst_14 {dimension_numbers = #tpu.dot_dimension_numbers<[1], [0], [0], [1], [0, 0, 1, 1], [], []>} : vector<8x32xf32>, vector<32x5xf32>, vector<8x5xf32> -> vector<8x5xf32>
    %c0_15 = arith.constant 0 : index
    %c0_16 = arith.constant 0 : index
    %19 = vector.load %arg7[%c0_15, %c0_16] : memref<1x5xf32, #tpu.memory_space<vmem>>, vector<1x5xf32>
    %20 = vector.broadcast %19 : vector<1x5xf32> to vector<8x5xf32>
    %21 = arith.addf %18, %20 : vector<8x5xf32>
    %cst_17 = arith.constant 0.00999999977 : f32
    %22 = vector.broadcast %cst_17 : f32 to vector<8x5xf32>
    %23 = arith.mulf %22, %21 : vector<8x5xf32>
    %24 = arith.maximumf %21, %23 : vector<8x5xf32>
    %c0_18 = arith.constant 0 : index
    %c0_19 = arith.constant 0 : index
    %25 = vector.load %arg8[%c0_18, %c0_19] : memref<8x5xf32, #tpu.memory_space<vmem>>, vector<8x5xf32>
    tpu.vector_store %arg8[%c0_18, %c0_19], %24 {strides = array<i32>} : memref<8x5xf32, #tpu.memory_space<vmem>>, vector<8x5xf32>,
    return
  }
  func.func @transform_0(%arg0: i32) -> (i32, i32) {
    %c0_i32 = arith.constant 0 : i32
    %c0_i32_0 = arith.constant 0 : i32
    return %arg0, %c0_i32 : i32, i32
  }
  func.func @transform_1(%arg0: i32) -> (i32, i32) {
    %c0_i32 = arith.constant 0 : i32
    %c0_i32_0 = arith.constant 0 : i32
    %c0_i32_1 = arith.constant 0 : i32
    return %c0_i32, %c0_i32_0 : i32, i32
  }
  func.func @transform_2(%arg0: i32) -> (i32, i32) {
    %c0_i32 = arith.constant 0 : i32
    %c0_i32_0 = arith.constant 0 : i32
    %c0_i32_1 = arith.constant 0 : i32
    return %c0_i32, %c0_i32_0 : i32, i32
  }
  func.func @transform_3(%arg0: i32) -> (i32, i32) {
    %c0_i32 = arith.constant 0 : i32
    %c0_i32_0 = arith.constant 0 : i32
    %c0_i32_1 = arith.constant 0 : i32
    return %c0_i32, %c0_i32_0 : i32, i32
  }
  func.func @transform_4(%arg0: i32) -> (i32, i32) {
    %c0_i32 = arith.constant 0 : i32
    %c0_i32_0 = arith.constant 0 : i32
    %c0_i32_1 = arith.constant 0 : i32
    return %c0_i32, %c0_i32_0 : i32, i32
  }
  func.func @transform_5(%arg0: i32) -> (i32, i32) {
    %c0_i32 = arith.constant 0 : i32
    %c0_i32_0 = arith.constant 0 : i32
    %c0_i32_1 = arith.constant 0 : i32
    return %c0_i32, %c0_i32_0 : i32, i32
  }
  func.func @transform_6(%arg0: i32) -> (i32, i32) {
    %c0_i32 = arith.constant 0 : i32
    %c0_i32_0 = arith.constant 0 : i32
    %c0_i32_1 = arith.constant 0 : i32
    return %c0_i32, %c0_i32_0 : i32, i32
  }
  func.func @transform_7(%arg0: i32) -> (i32, i32) {
    %c0_i32 = arith.constant 0 : i32
    %c0_i32_0 = arith.constant 0 : i32
    return %arg0, %c0_i32 : i32, i32
  }
}

</mosaic_0001>

<llo_original>
// kernel: tpu_custom_call.1
$region0: #{tpu_custom_call.1}
  #allocation0 [shape = 'u32[]', space=smem, size = 0x4, offset = 0x4, fixed_abs, tag = 'smem constant byte address 0x4 - core index']
  #allocation1 [shape = 'u32[72,128]{1,0:T(1,128)}', space=vmem, size = 0x9000, scoped, tag = 'internal scratch']
  %s0 = inlined_call_operand.vmem [shape: f32[8,64], index: 0, kind: input, shape index: {}]
  %s1 = inlined_call_operand.vmem [shape: f32[64,50], index: 1, kind: input, shape index: {}]
  %s2 = inlined_call_operand.vmem [shape: f32[1,50], index: 2, kind: input, shape index: {}]
  %s3 = inlined_call_operand.vmem [shape: f32[50,32], index: 3, kind: input, shape index: {}]
  %s4 = inlined_call_operand.vmem [shape: f32[1,32], index: 4, kind: input, shape index: {}]
  %s5 = inlined_call_operand.vmem [shape: f32[32,5], index: 5, kind: input, shape index: {}]
  %s6 = inlined_call_operand.vmem [shape: f32[1,5], index: 6, kind: input, shape index: {}]
  %s7 = inlined_call_operand.hbm [shape: f32[8,5], index: 7, kind: output, shape index: {}]
  %s8 = sld [smem:[#allocation0]]
  $region38: #{tpu_custom_call.1} parent=0
    _
  %s10 = ssub.s32 1, %s8
  %s11 = scalar_select 0, %s10, %s8
  $region1: #{tpu_custom_call.1} parent=0
    #allocation2 [shape = 'u8[4096]{0}', space=vmem, size = 0x1000, scoped, tag = 'output window, operand 0, single buffered']
    #allocation3 [shape = 's32[1]{0}', space=sflag, size = 0x4, scoped, tag = 'scoped memory for tpu_custom_call.1']
    %12 = vsyncpa [#allocation3], 0
    // Predicated region
    $region2: #{tpu_custom_call.1} parent=1 // pred_check
      _
    $region3: #{tpu_custom_call.1} parent=1 // pred_check_branch
      %14 = sbr.rel (0) target = $region5
    $region4: #{tpu_custom_call.1} parent=1 // pred_region
      _
    $region5: #{tpu_custom_call.1} parent=1 // pred_fallthru
      _
    // Predicated region
    $region6: #{tpu_custom_call.1} parent=1 // pred_check
      _
    $region7: #{tpu_custom_call.1} parent=1 // pred_check_branch
      %16 = sbr.rel (0) target = $region9
    $region8: #{tpu_custom_call.1} parent=1 // pred_region
      _
    $region9: #{tpu_custom_call.1} parent=1 // pred_fallthru
      _
    // Predicated region
    $region10: #{tpu_custom_call.1} parent=1 // pred_check
      _
    $region11: #{tpu_custom_call.1} parent=1 // pred_check_branch
      %18 = sbr.rel (0) target = $region13
    $region12: #{tpu_custom_call.1} parent=1 // pred_region
      _
    $region13: #{tpu_custom_call.1} parent=1 // pred_fallthru
      _
    // Predicated region
    $region14: #{tpu_custom_call.1} parent=1 // pred_check
      _
    $region15: #{tpu_custom_call.1} parent=1 // pred_check_branch
      %20 = sbr.rel (0) target = $region17
    $region16: #{tpu_custom_call.1} parent=1 // pred_region
      _
    $region17: #{tpu_custom_call.1} parent=1 // pred_fallthru
      _
    // Predicated region
    $region18: #{tpu_custom_call.1} parent=1 // pred_check
      _
    $region19: #{tpu_custom_call.1} parent=1 // pred_check_branch
      %22 = sbr.rel (0) target = $region21
    $region20: #{tpu_custom_call.1} parent=1 // pred_region
      _
    $region21: #{tpu_custom_call.1} parent=1 // pred_fallthru
      _
    // Predicated region
    $region22: #{tpu_custom_call.1} parent=1 // pred_check
      _
    $region23: #{tpu_custom_call.1} parent=1 // pred_check_branch
      %24 = sbr.rel (0) target = $region25
    $region24: #{tpu_custom_call.1} parent=1 // pred_region
      _
    $region25: #{tpu_custom_call.1} parent=1 // pred_fallthru
      _
    // Predicated region
    $region26: #{tpu_custom_call.1} parent=1 // pred_check
      _
    $region27: #{tpu_custom_call.1} parent=1 // pred_check_branch
      %26 = sbr.rel (0) target = $region29
    $region28: #{tpu_custom_call.1} parent=1 // pred_region
      _
    $region29: #{tpu_custom_call.1} parent=1 // pred_fallthru
      _
    %v27 = vld [vmem:[%s0] sm:$0xff]
    %v28 = vld [vmem:[%s1] sm:$0xff]
    %v29 = vld [vmem:[%s1 + $0x8] sm:$0xff]
    %v30 = vld [vmem:[%s1 + $0x10] sm:$0xff]
    %v31 = vld [vmem:[%s1 + $0x18] sm:$0xff]
    %v32 = vld [vmem:[%s1 + $0x20] sm:$0xff]
    %v33 = vld [vmem:[%s1 + $0x28] sm:$0xff]
    %v34 = vld [vmem:[%s1 + $0x30] sm:$0xff]
    %v35 = vld [vmem:[%s1 + $0x38] sm:$0xff]
    %v36 = vld [vmem:[%s2] sm:$0x1]
    %v38 = vperm.slane %v36, 0
    %vm40 = vcmask 523264
    %v42 = vsel %vm40, %v27, 0
    %44 = vmatpush.msra.mxu0 0.0
    %45 = vmatpush.msra.mxu0 0.0
    %46 = vmatpush.msra.mxu0 0.0
    %47 = vmatpush.msra.mxu0 0.0
    %48 = vmatpush.msra.mxu0 0.0
    %49 = vmatpush.msra.mxu0 0.0
    %50 = vmatpush.msra.mxu0 0.0
    %51 = vmatpush.msra.mxu0 0.0
    %52 = vmatpush.msra.mxu0 %v35
    %53 = vmatpush.msra.mxu0 %v34
    %54 = vmatpush.msra.mxu0 %v33
    %55 = vmatpush.msra.mxu0 %v32
    %56 = vmatpush.msra.mxu0 %v31
    %57 = vmatpush.msra.mxu0 %v30
    %58 = vmatpush.msra.mxu0 %v29
    %59 = vmatpush.msra.mxu0 %v28
    %60 = vmatmul.f32.gmra.mxu0 %v42
    %v61 = vpop.f32.mrf.mxu0
    %v62 = vadd.f32 %v38, %v61
    %63 = vdwg.mxu0
    %v64 = vmul.f32 %v62, 0.01
    %v65 = vmax.f32 %v62, %v64
    %v66 = vld [vmem:[%s3] sm:$0xff]
    %v67 = vld [vmem:[%s3 + $0x8] sm:$0xff]
    %v68 = vld [vmem:[%s3 + $0x10] sm:$0xff]
    %v69 = vld [vmem:[%s3 + $0x18] sm:$0xff]
    %v70 = vld [vmem:[%s3 + $0x20] sm:$0xff]
    %v71 = vld [vmem:[%s3 + $0x28] sm:$0xff]
    %v72 = vld [vmem:[%s3 + $0x30] sm:$0x3]
    %v73 = vld [vmem:[%s4] sm:$0x1]
    %v75 = vperm.slane %v73, 0
    %vm77 = vcmask 408576
    %v79 = vsel %vm77, %v65, 0
    %vm81 = vcmask 1041408
    %v83 = vsel %vm81, %v72, 0
    %85 = vmatpush.msra.mxu0 0.0
    %86 = vmatpush.msra.mxu0 0.0
    %87 = vmatpush.msra.mxu0 0.0
    %88 = vmatpush.msra.mxu0 0.0
    %89 = vmatpush.msra.mxu0 0.0
    %90 = vmatpush.msra.mxu0 0.0
    %91 = vmatpush.msra.mxu0 0.0
    %92 = vmatpush.msra.mxu0 0.0
    %93 = vmatpush.msra.mxu0 0.0
    %94 = vmatpush.msra.mxu0 %v83
    %95 = vmatpush.msra.mxu0 %v71
    %96 = vmatpush.msra.mxu0 %v70
    %97 = vmatpush.msra.mxu0 %v69
    %98 = vmatpush.msra.mxu0 %v68
    %99 = vmatpush.msra.mxu0 %v67
    %100 = vmatpush.msra.mxu0 %v66
    %101 = vmatmul.f32.gmra.mxu0 %v79
    %v102 = vpop.f32.mrf.mxu0
    %v103 = vadd.f32 %v75, %v102
    %104 = vdwg.mxu0
    %v105 = vmul.f32 %v103, 0.01
    %v106 = vmax.f32 %v103, %v105
    %v107 = vld [vmem:[%s5] sm:$0xff]
    %v108 = vld [vmem:[%s5 + $0x8] sm:$0xff]
    %v109 = vld [vmem:[%s5 + $0x10] sm:$0xff]
    %v110 = vld [vmem:[%s5 + $0x18] sm:$0xff]
    %v111 = vld [vmem:[%s6] sm:$0x1]
    %v113 = vperm.slane %v111, 0
    %vm115 = vcmask 261120
    %v117 = vsel %vm115, %v106, 0
    %119 = vmatpush.msra.mxu0 0.0
    %120 = vmatpush.msra.mxu0 0.0
    %121 = vmatpush.msra.mxu0 0.0
    %122 = vmatpush.msra.mxu0 0.0
    %123 = vmatpush.msra.mxu0 0.0
    %124 = vmatpush.msra.mxu0 0.0
    %125 = vmatpush.msra.mxu0 0.0
    %126 = vmatpush.msra.mxu0 0.0
    %127 = vmatpush.msra.mxu0 0.0
    %128 = vmatpush.msra.mxu0 0.0
    %129 = vmatpush.msra.mxu0 0.0
    %130 = vmatpush.msra.mxu0 0.0
    %131 = vmatpush.msra.mxu0 %v110
    %132 = vmatpush.msra.mxu0 %v109
    %133 = vmatpush.msra.mxu0 %v108
    %134 = vmatpush.msra.mxu0 %v107
    %135 = vmatmul.f32.gmra.mxu0 %v117
    %v136 = vpop.f32.mrf.mxu0
    %v137 = vadd.f32 %v113, %v136
    %138 = vdwg.mxu0
    %v139 = vmul.f32 %v137, 0.01
    %v140 = vmax.f32 %v137, %v139
    %vm141 = vcmask 39936
    %142 = vst.msk [vmem:[#allocation2] sm:$0xff] %vm141, %v140
    // Predicated region
    $region30: #{tpu_custom_call.1} parent=1 // pred_check
      _
    $region31: #{tpu_custom_call.1} parent=1 // pred_check_branch
      %144 = sbr.rel (0) target = $region33
    $region32: #{tpu_custom_call.1} parent=1 // pred_region
      %146 = vsyncadd [#allocation3], 0
      %s148 = sshll.u32 [#allocation2], 4
      %s149 = int_to_ptr.vmem [resolvable:$true] %s148
      %s150 = sshll.u32 %s7, 4
      %s151 = int_to_ptr.hbm [resolvable:$true] %s150
      %153 = dma.vmem_to_hbm [thread:$0]  %s149, 128, %s151, [#allocation3]
    $region33: #{tpu_custom_call.1} parent=1 // pred_fallthru
      _
    // Predicated region
    $region34: #{tpu_custom_call.1} parent=1 // pred_check
      _
    $region35: #{tpu_custom_call.1} parent=1 // pred_check_branch
      %155 = sbr.rel (0) target = $region37
    $region36: #{tpu_custom_call.1} parent=1 // pred_region
      %157 = dma.done [#allocation3], 128
    $region37: #{tpu_custom_call.1} parent=1 // pred_fallthru
      _
    %158 = vsyncpa [#allocation3], 1

</llo_original>
